<compile_context>
chip_gen: v7x
topology: tpu7x:2x2x1
jax: 0.10.0
libtpu: 0.0.40
codegen_flags: <defaults>
</compile_context>

<pallas_src>
import functools

import jax
import jax.numpy as jnp
from jax.experimental import pallas as pl
from jax.experimental.pallas import tpu as pltpu

_LANE = 128
_MAX_X_BLOCK_BYTES = 4 * 1024 * 1024  # per x block; pipeline double-buffers it


def _stats_pool_kernel(len_ref, x_ref, out_ref, sum_ref, sq_ref,
                       *, eps, ddof, xvector):
    """Grid = (batch tiles, time tiles); time is the reduction axis.

    len_ref : VMEM int32[TB, 1, 1]        per-row valid lengths
    x_ref   : VMEM x.dtype[TB, D, TT]     current input tile
    out_ref : VMEM x.dtype[TB, n_stats, D]
    sum_ref : VMEM f32[TB, D]             running masked sum        (scratch)
    sq_ref  : VMEM f32[TB, D]             running masked sum of sq  (scratch)
    """
    ti = pl.program_id(1)

    @pl.when(ti == 0)
    def _init():
        sum_ref[...] = jnp.zeros_like(sum_ref)
        if xvector:
            sq_ref[...] = jnp.zeros_like(sq_ref)

    x = x_ref[...].astype(jnp.float32)                     # (TB, D, TT) f32
    lens = len_ref[...]                                    # (TB, 1, 1) int32

    tb, _, tt = x.shape
    # 0/1 mask of valid time steps for this tile: global_t < length[row]
    t_idx = ti * tt + jax.lax.broadcasted_iota(jnp.int32, (tb, 1, tt), 2)
    maskf = (t_idx < lens).astype(jnp.float32)             # (TB, 1, TT)

    xm = x * maskf                                         # broadcast over D
    sum_ref[...] += jnp.sum(xm, axis=-1)
    if xvector:
        sq_ref[...] += jnp.sum(xm * xm, axis=-1)

    @pl.when(ti == pl.num_programs(1) - 1)
    def _finalize():
        # TODO(synk): length==0 (mean) or length==1 with biased=True (std)
        # divides by zero, exactly as in the PyTorch module.
        l_f = lens[:, 0, :].astype(jnp.float32)            # (TB, 1)
        s = sum_ref[...]
        mean = s / l_f                                     # (TB, D)
        out_ref[:, 0, :] = mean.astype(out_ref.dtype)
        if xvector:
            # single-pass variance: sum((x-mean)^2) == sumsq - L*mean^2
            # (f32 accumulation; fine unless |mean| >> std)
            var = (sq_ref[...] - s * mean) / (l_f - ddof)
            std = jnp.sqrt(jnp.maximum(var, eps))
            out_ref[:, 1, :] = std.astype(out_ref.dtype)


def _pick_batch_tile(b):
    for cand in (8, 4, 2):
        if b % cand == 0:
            return cand
    return 1


def stats_pool(encoder_output, length=None, *, pool_mode="xvector",
               eps=1e-10, biased=True, max_time_tile=None):
    """JAX/Pallas equivalent of StatsPoolLayer.forward.

    encoder_output: [B, D, T], any float dtype (streamed as-is, f32 accumulation)
    length:         optional int[B] of valid time steps
    returns:        [B, 2*D] for 'xvector', [B, D] for 'tap' (input dtype)
    """
    if pool_mode not in ("xvector", "tap"):
        raise ValueError(f"Pool mode must be one of {{'xvector', 'tap'}}; got {pool_mode}")

    x = encoder_output                      # keep native dtype; cast in-kernel
    B, D, T = x.shape
    out_dtype = x.dtype
    itemsize = jnp.dtype(x.dtype).itemsize

    if length is None:
        # torch .mean(-1)/.std(-1): full length, unbiased (T-1), no eps clamp.
        lengths = jnp.full((B,), T, dtype=jnp.int32)
        k_eps = 0.0
        ddof = 1.0
    else:
        lengths = length.astype(jnp.int32)
        k_eps = float(eps)
        # Mirrors the PyTorch module exactly: biased=True -> divide by (L - 1).
        ddof = 1.0 if biased else 0.0

    xvector = pool_mode == "xvector"
    n_stats = 2 if xvector else 1

    TB = _pick_batch_tile(B)

    # Time tile sized so one x block stays <= _MAX_X_BLOCK_BYTES.
    cap = _MAX_X_BLOCK_BYTES // (TB * D * itemsize)
    tt_cap = max(_LANE, (cap // _LANE) * _LANE)
    if max_time_tile is not None:
        tt_cap = max(_LANE, (int(max_time_tile) // _LANE) * _LANE)

    if T <= tt_cap:
        TT = T
    else:
        TT = tt_cap
        rem = T % TT
        if rem:
            # Pad time with zeros; the in-kernel length mask drops padded steps.
            x = jnp.pad(x, ((0, 0), (0, 0), (0, TT - rem)))
            T = x.shape[2]

    grid = (B // TB, T // TT)
    lengths3 = lengths.reshape(B, 1, 1)

    kernel = functools.partial(_stats_pool_kernel, eps=k_eps, ddof=ddof,
                               xvector=xvector)

    out = pl.pallas_call(
        kernel,
        out_shape=jax.ShapeDtypeStruct((B, n_stats, D), out_dtype),
        grid_spec=pltpu.PrefetchScalarGridSpec(
            num_scalar_prefetch=0,
            grid=grid,
            in_specs=[
                pl.BlockSpec((TB, 1, 1), lambda bi, ti: (bi, 0, 0)),
                pl.BlockSpec((TB, D, TT), lambda bi, ti: (bi, 0, ti)),
            ],
            out_specs=pl.BlockSpec((TB, n_stats, D), lambda bi, ti: (bi, 0, 0)),
            scratch_shapes=[pltpu.VMEM((TB, D), jnp.float32),
                            pltpu.VMEM((TB, D), jnp.float32)],
        ),
        compiler_params=pltpu.CompilerParams(
            dimension_semantics=("parallel", "arbitrary")),
        cost_estimate=pl.CostEstimate(
            flops=int(4 * B * D * T),
            transcendentals=0,
            bytes_accessed=int(B * D * T * itemsize
                               + B * n_stats * D * itemsize + B * 4)),
    )(lengths3, x)

    # (B, n_stats, D) -> (B, n_stats*D): contiguous, i.e. [mean ++ std] per row.
    return out.reshape(B, n_stats * D)


# ----------------------- pure-JAX reference for checking ----------------------
def _stats_pool_ref(x, length=None, *, pool_mode="xvector", eps=1e-10, biased=True):
    x = x.astype(jnp.float32)
    B, D, T = x.shape
    if length is None:
        mean = x.mean(axis=-1)
        if pool_mode == "xvector":
            std = jnp.sqrt(jnp.sum((x - mean[..., None]) ** 2, axis=-1) / (T - 1))
            return jnp.concatenate([mean, std], axis=-1)
        return mean
    valid = (jnp.arange(T)[None, :] < length[:, None])[:, None, :]
    xm = jnp.where(valid, x, 0.0)
    Lf = length.astype(jnp.float32)
    mean = xm.sum(-1) / Lf[:, None]
    if pool_mode == "xvector":
        diff = jnp.where(valid, xm - mean[..., None], 0.0)
        var = (diff ** 2).sum(-1) / (Lf[:, None] - (1.0 if biased else 0.0))
        std = jnp.sqrt(jnp.maximum(var, eps))
        return jnp.concatenate([mean, std], axis=-1)
    return mean


if __name__ == "__main__":
    key = jax.random.PRNGKey(0)
    k1, k2 = jax.random.split(key)

    B, D, T = 2, 16, 32
    x = jax.random.normal(k1, (B, D, T), dtype=jnp.float32)
    lengths = jnp.array([32, 20], dtype=jnp.int32)

    # xvector mode with explicit lengths
    out_xv = stats_pool(x, lengths, pool_mode="xvector")
    jax.block_until_ready(out_xv)
    ref_xv = _stats_pool_ref(x, lengths, pool_mode="xvector")
    assert out_xv.shape == (B, 2 * D)
    assert jnp.allclose(out_xv, ref_xv, atol=1e-4, rtol=1e-4)

    # xvector mode without lengths (torch mean/std defaults)
    out_none = stats_pool(x, None, pool_mode="xvector")
    jax.block_until_ready(out_none)
    ref_none = _stats_pool_ref(x, None, pool_mode="xvector")
    assert jnp.allclose(out_none, ref_none, atol=1e-4, rtol=1e-4)

    # tap mode (mean only)
    out_tap = stats_pool(x, lengths, pool_mode="tap")
    jax.block_until_ready(out_tap)
    ref_tap = _stats_pool_ref(x, lengths, pool_mode="tap")
    assert out_tap.shape == (B, D)
    assert jnp.allclose(out_tap, ref_tap, atol=1e-4, rtol=1e-4)

    # multi-tile time reduction (exercises the accumulator + padding path)
    B2, D2, T2 = 2, 16, 200
    x2 = jax.random.normal(k2, (B2, D2, T2), dtype=jnp.float32)
    len2 = jnp.array([200, 130], dtype=jnp.int32)
    out_tiled = stats_pool(x2, len2, pool_mode="xvector", max_time_tile=128)
    jax.block_until_ready(out_tiled)
    ref_tiled = _stats_pool_ref(x2, len2, pool_mode="xvector")
    assert out_tiled.shape == (B2, 2 * D2)
    assert jnp.allclose(out_tiled, ref_tiled, atol=1e-4, rtol=1e-4)

    # bf16 input streamed natively, f32 accumulation in-kernel, bf16 output
    x_bf = x.astype(jnp.bfloat16)
    out_bf = stats_pool(x_bf, lengths, pool_mode="xvector")
    jax.block_until_ready(out_bf)
    ref_bf = _stats_pool_ref(x_bf.astype(jnp.float32), lengths, pool_mode="xvector")
    assert out_bf.dtype == jnp.bfloat16
    assert jnp.allclose(out_bf.astype(jnp.float32), ref_bf, atol=3e-2, rtol=3e-2)

    print("KERNEL_OK")
</pallas_src>

<mosaic_0001>
module attributes {stable_mosaic.version = 11 : i64} {
  func.func @_stats_pool_kernel(%arg0: i32, %arg1: i32, %arg2: memref<2x1x1xi32, #tpu.memory_space<vmem>>, %arg3: memref<2x16x32xf32, #tpu.memory_space<vmem>>, %arg4: memref<2x2x16xf32, #tpu.memory_space<vmem>>, %arg5: memref<2x16xf32, #tpu.memory_space<vmem>>, %arg6: memref<2x16xf32, #tpu.memory_space<vmem>>) attributes {dimension_semantics = [#tpu.dimension_semantics<parallel>, #tpu.dimension_semantics<arbitrary>], iteration_bounds = array<i64: 1, 1>, scalar_prefetch = 0 : i64, scratch_operands = 2 : i64, tpu.core_type = #tpu.core_type<tc>, window_params = [{transform_indices = @transform_0, window_bounds = array<i64: 2, 1, 1>}, {transform_indices = @transform_1, window_bounds = array<i64: 2, 16, 32>}, {transform_indices = @transform_2, window_bounds = array<i64: 2, 2, 16>}]} {
    %c0_i32 = arith.constant 0 : i32
    %0 = arith.cmpi eq, %arg1, %c0_i32 : i32
    %1 = arith.extui %0 : i1 to i32
    %c0_i32_0 = arith.constant 0 : i32
    %2 = arith.cmpi ne, %1, %c0_i32_0 : i32
    scf.if %2 {
      %cst_17 = arith.constant 0.000000e+00 : f32
      %27 = vector.broadcast %cst_17 : f32 to vector<2x16xf32>
      %c0_18 = arith.constant 0 : index
      %c0_19 = arith.constant 0 : index
      %28 = vector.load %arg5[%c0_18, %c0_19] : memref<2x16xf32, #tpu.memory_space<vmem>>, vector<2x16xf32>
      tpu.vector_store %arg5[%c0_18, %c0_19], %27 {strides = array<i32>} : memref<2x16xf32, #tpu.memory_space<vmem>>, vector<2x16xf32>,
      %cst_20 = arith.constant 0.000000e+00 : f32
      %29 = vector.broadcast %cst_20 : f32 to vector<2x16xf32>
      %c0_21 = arith.constant 0 : index
      %c0_22 = arith.constant 0 : index
      %30 = vector.load %arg6[%c0_21, %c0_22] : memref<2x16xf32, #tpu.memory_space<vmem>>, vector<2x16xf32>
      tpu.vector_store %arg6[%c0_21, %c0_22], %29 {strides = array<i32>} : memref<2x16xf32, #tpu.memory_space<vmem>>, vector<2x16xf32>,
    } else {
    }
    %c0 = arith.constant 0 : index
    %c0_1 = arith.constant 0 : index
    %c0_2 = arith.constant 0 : index
    %3 = vector.load %arg3[%c0, %c0_1, %c0_2] : memref<2x16x32xf32, #tpu.memory_space<vmem>>, vector<2x16x32xf32>
    %c0_3 = arith.constant 0 : index
    %c0_4 = arith.constant 0 : index
    %c0_5 = arith.constant 0 : index
    %4 = vector.load %arg2[%c0_3, %c0_4, %c0_5] : memref<2x1x1xi32, #tpu.memory_space<vmem>>, vector<2x1x1xi32>
    %c32_i32 = arith.constant 32 : i32
    %5 = arith.muli %arg1, %c32_i32 : i32
    %6 = tpu.iota {dimensions = array<i32: 2>} : vector<2x1x32xi32>
    %7 = vector.broadcast %5 : i32 to vector<2x1x32xi32>
    %8 = arith.addi %7, %6 : vector<2x1x32xi32>
    %9 = vector.broadcast %4 : vector<2x1x1xi32> to vector<2x1x32xi32>
    %10 = arith.cmpi slt, %8, %9 : vector<2x1x32xi32>
    %11 = arith.extui %10 : vector<2x1x32xi1> to vector<2x1x32xi32>
    %12 = arith.sitofp %11 : vector<2x1x32xi32> to vector<2x1x32xf32>
    %13 = vector.broadcast %12 : vector<2x1x32xf32> to vector<2x16x32xf32>
    %14 = arith.mulf %3, %13 : vector<2x16x32xf32>
    %c0_6 = arith.constant 0 : index
    %c0_7 = arith.constant 0 : index
    %15 = vector.load %arg5[%c0_6, %c0_7] : memref<2x16xf32, #tpu.memory_space<vmem>>, vector<2x16xf32>
    %cst = arith.constant dense<0.000000e+00> : vector<2x16xf32>
    %16 = vector.multi_reduction <add>, %14, %cst [2] : vector<2x16x32xf32> to vector<2x16xf32>
    %17 = arith.addf %15, %16 : vector<2x16xf32>
    %c0_8 = arith.constant 0 : index
    %c0_9 = arith.constant 0 : index
    %18 = vector.load %arg5[%c0_8, %c0_9] : memref<2x16xf32, #tpu.memory_space<vmem>>, vector<2x16xf32>
    tpu.vector_store %arg5[%c0_8, %c0_9], %17 {strides = array<i32>} : memref<2x16xf32, #tpu.memory_space<vmem>>, vector<2x16xf32>,
    %c0_10 = arith.constant 0 : index
    %c0_11 = arith.constant 0 : index
    %19 = vector.load %arg6[%c0_10, %c0_11] : memref<2x16xf32, #tpu.memory_space<vmem>>, vector<2x16xf32>
    %20 = arith.mulf %14, %14 : vector<2x16x32xf32>
    %cst_12 = arith.constant dense<0.000000e+00> : vector<2x16xf32>
    %21 = vector.multi_reduction <add>, %20, %cst_12 [2] : vector<2x16x32xf32> to vector<2x16xf32>
    %22 = arith.addf %19, %21 : vector<2x16xf32>
    %c0_13 = arith.constant 0 : index
    %c0_14 = arith.constant 0 : index
    %23 = vector.load %arg6[%c0_13, %c0_14] : memref<2x16xf32, #tpu.memory_space<vmem>>, vector<2x16xf32>
    tpu.vector_store %arg6[%c0_13, %c0_14], %22 {strides = array<i32>} : memref<2x16xf32, #tpu.memory_space<vmem>>, vector<2x16xf32>,
    %c0_i32_15 = arith.constant 0 : i32
    %24 = arith.cmpi eq, %arg1, %c0_i32_15 : i32
    %25 = arith.extui %24 : i1 to i32
    %c0_i32_16 = arith.constant 0 : i32
    %26 = arith.cmpi ne, %25, %c0_i32_16 : i32
    scf.if %26 {
      %27 = vector.shape_cast %4 : vector<2x1x1xi32> to vector<2x1xi32>
      %28 = arith.sitofp %27 : vector<2x1xi32> to vector<2x1xf32>
      %c0_17 = arith.constant 0 : index
      %c0_18 = arith.constant 0 : index
      %29 = vector.load %arg5[%c0_17, %c0_18] : memref<2x16xf32, #tpu.memory_space<vmem>>, vector<2x16xf32>
      %30 = vector.broadcast %28 : vector<2x1xf32> to vector<2x16xf32>
      %31 = arith.divf %29, %30 : vector<2x16xf32>
      %c0_19 = arith.constant 0 : index
      %c0_20 = arith.constant 0 : index
      %c0_21 = arith.constant 0 : index
      %32 = vector.load %arg4[%c0_19, %c0_20, %c0_21] : memref<2x2x16xf32, #tpu.memory_space<vmem>>, vector<2x1x16xf32>
      %33 = vector.shape_cast %32 : vector<2x1x16xf32> to vector<2x16xf32>
      %34 = vector.shape_cast %31 : vector<2x16xf32> to vector<2x1x16xf32>
      tpu.vector_store %arg4[%c0_19, %c0_20, %c0_21], %34 {strides = array<i32>} : memref<2x2x16xf32, #tpu.memory_space<vmem>>, vector<2x1x16xf32>,
      %c0_22 = arith.constant 0 : index
      %c0_23 = arith.constant 0 : index
      %35 = vector.load %arg6[%c0_22, %c0_23] : memref<2x16xf32, #tpu.memory_space<vmem>>, vector<2x16xf32>
      %36 = arith.mulf %29, %31 : vector<2x16xf32>
      %37 = arith.subf %35, %36 : vector<2x16xf32>
      %cst_24 = arith.constant 1.000000e+00 : f32
      %38 = vector.broadcast %cst_24 : f32 to vector<2x1xf32>
      %39 = arith.subf %28, %38 : vector<2x1xf32>
      %40 = vector.broadcast %39 : vector<2x1xf32> to vector<2x16xf32>
      %41 = arith.divf %37, %40 : vector<2x16xf32>
      %cst_25 = arith.constant 1.000000e-10 : f32
      %42 = vector.broadcast %cst_25 : f32 to vector<2x16xf32>
      %43 = arith.maximumf %41, %42 : vector<2x16xf32>
      %44 = math.sqrt %43 : vector<2x16xf32>
      %c0_26 = arith.constant 0 : index
      %c1 = arith.constant 1 : index
      %c0_27 = arith.constant 0 : index
      %45 = vector.load %arg4[%c0_26, %c1, %c0_27] : memref<2x2x16xf32, #tpu.memory_space<vmem>>, vector<2x1x16xf32>
      %46 = vector.shape_cast %45 : vector<2x1x16xf32> to vector<2x16xf32>
      %47 = vector.shape_cast %44 : vector<2x16xf32> to vector<2x1x16xf32>
      tpu.vector_store %arg4[%c0_26, %c1, %c0_27], %47 {strides = array<i32>} : memref<2x2x16xf32, #tpu.memory_space<vmem>>, vector<2x1x16xf32>,
    } else {
    }
    return
  }
  func.func @transform_0(%arg0: i32, %arg1: i32) -> (i32, i32, i32) {
    %c0_i32 = arith.constant 0 : i32
    %c0_i32_0 = arith.constant 0 : i32
    %c0_i32_1 = arith.constant 0 : i32
    return %arg0, %c0_i32, %c0_i32_0 : i32, i32, i32
  }
  func.func @transform_1(%arg0: i32, %arg1: i32) -> (i32, i32, i32) {
    %c0_i32 = arith.constant 0 : i32
    %c0_i32_0 = arith.constant 0 : i32
    return %arg0, %c0_i32, %arg1 : i32, i32, i32
  }
  func.func @transform_2(%arg0: i32, %arg1: i32) -> (i32, i32, i32) {
    %c0_i32 = arith.constant 0 : i32
    %c0_i32_0 = arith.constant 0 : i32
    %c0_i32_1 = arith.constant 0 : i32
    return %arg0, %c0_i32, %c0_i32_0 : i32, i32, i32
  }
}

</mosaic_0001>

<llo_original>
// kernel: tpu_custom_call.1
$region0: #{tpu_custom_call.1}
  #allocation0 [shape = 'u32[]', space=smem, size = 0x4, offset = 0x4, fixed_abs, tag = 'smem constant byte address 0x4 - core index']
  #allocation1 [shape = 'u32[144,128]{1,0:T(1,128)}', space=vmem, size = 0x12000, scoped, tag = 'internal scratch']
  #allocation2 [shape = 'f32[2,16]{1,0:T(2,128)}', space=vmem, size = 0x400, scoped, tag = 'scratch operand']
  #allocation3 [shape = 'f32[2,16]{1,0:T(2,128)}', space=vmem, size = 0x400, scoped, tag = 'scratch operand']
  %s0 = inlined_call_operand.vmem [shape: s32[2,1,1], index: 0, kind: input, shape index: {}]
  %s1 = inlined_call_operand.hbm [shape: f32[2,16,32], index: 1, kind: input, shape index: {}]
  %s2 = inlined_call_operand.hbm [shape: f32[2,2,16], index: 2, kind: output, shape index: {}]
  %s3 = sld [smem:[#allocation0]]
  $region30: #{tpu_custom_call.1} parent=0
    _
  %s5 = ssub.s32 1, %s3
  %s6 = scalar_select 0, %s5, %s3
  $region1: #{tpu_custom_call.1} parent=0
    #allocation4 [shape = 'u8[16384]{0}', space=vmem, size = 0x4000, scoped, tag = 'input window, operand 1, single buffered']
    #allocation5 [shape = 's32[1]{0}', space=sflag, size = 0x4, scoped, tag = 'scoped memory for tpu_custom_call.1']
    #allocation6 [shape = 's32[1]{0}', space=sflag, size = 0x4, scoped, tag = 'scoped memory for tpu_custom_call.1']
    #allocation7 [shape = 'u8[2048]{0}', space=vmem, size = 0x800, scoped, tag = 'output window, operand 0, single buffered']
    %7 = vsyncpa [#allocation5], 0
    %8 = vsyncpa [#allocation6], 0
    // Predicated region
    $region2: #{tpu_custom_call.1} parent=1 // pred_check
      _
    $region3: #{tpu_custom_call.1} parent=1 // pred_check_branch
      %10 = sbr.rel (0) target = $region5
    $region4: #{tpu_custom_call.1} parent=1 // pred_region
      _
    $region5: #{tpu_custom_call.1} parent=1 // pred_fallthru
      _
    // Predicated region
    $region6: #{tpu_custom_call.1} parent=1 // pred_check
      _
    $region7: #{tpu_custom_call.1} parent=1 // pred_check_branch
      %12 = sbr.rel (0) target = $region9
    $region8: #{tpu_custom_call.1} parent=1 // pred_region
      %s14 = ssub.s32 512, 512
      %15 = vsyncadd [#allocation5], %s14
      %s16 = sshll.u32 [#allocation4], 4
      %s17 = int_to_ptr.vmem [resolvable:$true] %s16
      %22 = dma.hbm_to_vmem [thread:$0]  %s1, 512, %s17, [#allocation5], 128, 128, 8
    $region9: #{tpu_custom_call.1} parent=1 // pred_fallthru
      _
    // Predicated region
    $region10: #{tpu_custom_call.1} parent=1 // pred_check
      _
    $region11: #{tpu_custom_call.1} parent=1 // pred_check_branch
      %24 = sbr.rel (0) target = $region13
    $region12: #{tpu_custom_call.1} parent=1 // pred_region
      %25 = dma.done [#allocation5], 512
    $region13: #{tpu_custom_call.1} parent=1 // pred_fallthru
      _
    %p26 = scmp.eq.s32.totalorder 0, 0
    // Predicated region
    $region14: #{tpu_custom_call.1} parent=1 // pred_check
      %p27 = pneg %p26
    $region15: #{tpu_custom_call.1} parent=1 // pred_check_branch
      %29 = sbr.rel (%p27) target = $region17
    $region16: #{tpu_custom_call.1} parent=1 // pred_region
      %vm30 = vcmask 123904
      %31 = vst.msk [vmem:[#allocation2] sm:$0x3] %vm30, 0.0
      %32 = vst.msk [vmem:[#allocation3] sm:$0x3] %vm30, 0.0
    $region17: #{tpu_custom_call.1} parent=1 // pred_fallthru
      _
    %v33 = vld [vmem:[#allocation4] sm:$0xff]
    %v34 = vld [vmem:[#allocation4 + $0x8] sm:$0xff]
    %v35 = vld [vmem:[#allocation4 + $0x10] sm:$0xff]
    %v36 = vld [vmem:[#allocation4 + $0x18] sm:$0xff]
    %v37 = vld [vmem:[%s0] sm:$0x1]
    %v38 = vld [vmem:[%s0 + $0x1] sm:$0x1]
    %s39 = smul.u32 0, 32
    %v40 = vlaneseq
    %v41 = vand.u32 %v40, 127
    %v42 = vstv %s39
    %v43 = vadd.s32 %v42, %v41
    %44 = vset.pattern.permute.xlu0 0
    %45 = vperm.xlu0 %44, %v37
    %v46 = vpop.permute.xlu0 %45
    %v47 = vlaneseq
    %v48 = vshrl.u32 %v47, 7
    %v49 = vsub.s32 0, %v48
    %v50 = vrot.slane %v46, %v49
    %51 = vset.pattern.permute.xlu0 0
    %52 = vperm.xlu0 %51, %v38
    %v53 = vpop.permute.xlu0 %52
    %v54 = vlaneseq
    %v55 = vshrl.u32 %v54, 7
    %v56 = vsub.s32 0, %v55
    %v57 = vrot.slane %v53, %v56
    %vm58 = vcmp.lt.s32.totalorder %v43, %v50
    %vm59 = vcmp.lt.s32.totalorder %v43, %v57
    %v60 = vsel %vm58, 1, 0
    %v61 = vsel %vm59, 1, 0
    %v62 = vcvt.s32.f32 %v60
    %v63 = vcvt.s32.f32 %v61
    %v64 = vmul.f32 %v33, %v62
    %v65 = vmul.f32 %v34, %v62
    %v66 = vmul.f32 %v35, %v63
    %v67 = vmul.f32 %v36, %v63
    %v68 = vld [vmem:[#allocation2] sm:$0x3]
    %vm69 = vcmask 261120
    %v70 = vsel %vm69, %v64, 0.0
    %71 = vadd.xlane.f32.xlu0 %v70
    %v72 = vpop.xlane.xlu0 %71
    %v73 = vsel %vm69, %v65, 0.0
    %74 = vadd.xlane.f32.xlu0 %v73
    %v75 = vpop.xlane.xlu0 %74
    %v76 = vsel %vm69, %v66, 0.0
    %77 = vadd.xlane.f32.xlu0 %v76
    %v78 = vpop.xlane.xlu0 %77
    %v79 = vsel %vm69, %v67, 0.0
    %80 = vadd.xlane.f32.xlu0 %v79
    %v81 = vpop.xlane.xlu0 %80
    %v86 = vlaneseq
    %v87 = vshrl.u32 %v86, 7
    %v88 = vsub.s32 %v41, %v87
    %v89 = vrot.slane %v72, %v88
    %v90 = vadd.s32 %v41, 4294967288
    %v91 = vlaneseq
    %v92 = vshrl.u32 %v91, 7
    %v93 = vsub.s32 %v90, %v92
    %v94 = vrot.slane %v75, %v93
    %vm95 = vcmask 130112
    %v96 = vsel %vm95, %v94, %v89
    %v97 = vlaneseq
    %v98 = vshrl.u32 %v97, 7
    %v99 = vsub.s32 %v41, %v98
    %v100 = vrot.slane %v78, %v99
    %v101 = vlaneseq
    %v102 = vshrl.u32 %v101, 7
    %v103 = vsub.s32 %v90, %v102
    %v104 = vrot.slane %v81, %v103
    %v105 = vsel %vm95, %v104, %v100
    %vm106 = vcmask 1041409
    %v107 = vsel %vm106, %v105, %v96
    %v109 = vadd.f32 %v68, %v107
    %vm110 = vcmask 123904
    %111 = vst.msk [vmem:[#allocation2] sm:$0x3] %vm110, %v109
    %v112 = vld [vmem:[#allocation3] sm:$0x3]
    %v113 = vmul.f32 %v64, %v64
    %v114 = vmul.f32 %v65, %v65
    %v115 = vmul.f32 %v66, %v66
    %v116 = vmul.f32 %v67, %v67
    %v117 = vsel %vm69, %v113, 0.0
    %118 = vadd.xlane.f32.xlu0 %v117
    %v119 = vpop.xlane.xlu0 %118
    %v120 = vsel %vm69, %v114, 0.0
    %121 = vadd.xlane.f32.xlu0 %v120
    %v122 = vpop.xlane.xlu0 %121
    %v123 = vsel %vm69, %v115, 0.0
    %124 = vadd.xlane.f32.xlu0 %v123
    %v125 = vpop.xlane.xlu0 %124
    %v126 = vsel %vm69, %v116, 0.0
    %127 = vadd.xlane.f32.xlu0 %v126
    %v128 = vpop.xlane.xlu0 %127
    %v133 = vlaneseq
    %v134 = vshrl.u32 %v133, 7
    %v135 = vsub.s32 %v41, %v134
    %v136 = vrot.slane %v119, %v135
    %v137 = vlaneseq
    %v138 = vshrl.u32 %v137, 7
    %v139 = vsub.s32 %v90, %v138
    %v140 = vrot.slane %v122, %v139
    %v141 = vsel %vm95, %v140, %v136
    %v142 = vlaneseq
    %v143 = vshrl.u32 %v142, 7
    %v144 = vsub.s32 %v41, %v143
    %v145 = vrot.slane %v125, %v144
    %v146 = vlaneseq
    %v147 = vshrl.u32 %v146, 7
    %v148 = vsub.s32 %v90, %v147
    %v149 = vrot.slane %v128, %v148
    %v150 = vsel %vm95, %v149, %v145
    %v151 = vsel %vm106, %v150, %v141
    %v153 = vadd.f32 %v112, %v151
    %154 = vst.msk [vmem:[#allocation3] sm:$0x3] %vm110, %v153
    // Predicated region
    $region18: #{tpu_custom_call.1} parent=1 // pred_check
      %p155 = pneg %p26
    $region19: #{tpu_custom_call.1} parent=1 // pred_check_branch
      %157 = sbr.rel (%p155) target = $region21
    $region20: #{tpu_custom_call.1} parent=1 // pred_region
      %v158 = vcvt.s32.f32 %v37
      %v159 = vcvt.s32.f32 %v38
      %v160 = vld [vmem:[#allocation2] sm:$0x3]
      %162 = vset.pattern.permute.xlu0 0
      %163 = vperm.xlu0 %162, %v158
      %v164 = vpop.permute.xlu0 %163
      %v166 = vlaneseq
      %v167 = vshrl.u32 %v166, 7
      %v168 = vsub.s32 0, %v167
      %v169 = vrot.slane %v164, %v168
      %171 = vset.pattern.permute.xlu0 0
      %172 = vperm.xlu0 %171, %v159
      %v173 = vpop.permute.xlu0 %172
      %v175 = vlaneseq
      %v176 = vshrl.u32 %v175, 7
      %v177 = vsub.s32 0, %v176
      %v178 = vrot.slane %v173, %v177
      %v181 = vcombine.low %v169, %v178
      %v183 = vunpack.c.l.s4 1966171168
      %v184 = vunpack.c.0.s8 %v183
      %v185 = vlaneseq
      %v186 = vshrl.u32 %v185, 7
      %v187 = vsub.s32 %v184, %v186
      %v188 = vrot.slane %v181, %v187
      %v190 = vunpack.c.l.s4 1966171168
      %v191 = vunpack.c.0.s8 %v190
      %v192 = vlaneseq
      %v193 = vshrl.u32 %v192, 7
      %v194 = vsub.s32 %v191, %v193
      %v195 = vrot.slane %v188, %v194
      %v197 = vrcp.pop %v195
      %v198 = vmul.f32 %v160, %v197
      %v201 = vunpack.c.l.s4 1966171168
      %v202 = vunpack.c.0.s8 %v201
      %v203 = vlaneseq
      %v204 = vshrl.u32 %v203, 7
      %v205 = vsub.s32 %v202, %v204
      %v206 = vrot.slane %v198, %v205
      %v207 = vcombine.high %v206, %v206
      %v209 = vunpack.c.l.s4 1966171168
      %v210 = vunpack.c.0.s8 %v209
      %v211 = vlaneseq
      %v212 = vshrl.u32 %v211, 7
      %v213 = vsub.s32 %v210, %v212
      %v214 = vrot.slane %v206, %v213
      %v216 = vunpack.c.l.s4 1966171168
      %v217 = vunpack.c.0.s8 %v216
      %v218 = vlaneseq
      %v219 = vshrl.u32 %v218, 7
      %v220 = vsub.s32 %v217, %v219
      %v221 = vrot.slane %v207, %v220
      %vm224 = vcmask 122880
      %225 = vst.msk [vmem:[#allocation7] sm:$0x1] %vm224, %v214
      %226 = vst.msk [vmem:[#allocation7 + $0x2] sm:$0x1] %vm224, %v221
      %v227 = vld [vmem:[#allocation3] sm:$0x3]
      %v228 = vmul.f32 %v160, %v198
      %v229 = vsub.f32 %v227, %v228
      %v230 = vsub.f32 %v158, 1.0
      %v231 = vsub.f32 %v159, 1.0
      %233 = vset.pattern.permute.xlu0 0
      %234 = vperm.xlu0 %233, %v230
      %v235 = vpop.permute.xlu0 %234
      %v237 = vlaneseq
      %v238 = vshrl.u32 %v237, 7
      %v239 = vsub.s32 0, %v238
      %v240 = vrot.slane %v235, %v239
      %242 = vset.pattern.permute.xlu0 0
      %243 = vperm.xlu0 %242, %v231
      %v244 = vpop.permute.xlu0 %243
      %v246 = vlaneseq
      %v247 = vshrl.u32 %v246, 7
      %v248 = vsub.s32 0, %v247
      %v249 = vrot.slane %v244, %v248
      %v252 = vcombine.low %v240, %v249
      %v254 = vunpack.c.l.s4 1966171168
      %v255 = vunpack.c.0.s8 %v254
      %v256 = vlaneseq
      %v257 = vshrl.u32 %v256, 7
      %v258 = vsub.s32 %v255, %v257
      %v259 = vrot.slane %v252, %v258
      %v261 = vunpack.c.l.s4 1966171168
      %v262 = vunpack.c.0.s8 %v261
      %v263 = vlaneseq
      %v264 = vshrl.u32 %v263, 7
      %v265 = vsub.s32 %v262, %v264
      %v266 = vrot.slane %v259, %v265
      %v268 = vrcp.pop %v266
      %v269 = vmul.f32 %v229, %v268
      %v270 = vmax.f32 %v269, 1e-10
      %v271 = vrsqrt.pop %v270
      %v272 = vmul.f32 %v270, %v271
      %vm273 = vcmp.eq.f32.partialorder %v270, inf
      %v274 = vsel %vm273, %v270, %v272
      %vm275 = vcmp.eq.f32.partialorder %v270, 0.0
      %v276 = vand.u32 %v270, 2147483648
      %v277 = vsel %vm275, %v276, %v274
      %v280 = vunpack.c.l.s4 1966171168
      %v281 = vunpack.c.0.s8 %v280
      %v282 = vlaneseq
      %v283 = vshrl.u32 %v282, 7
      %v284 = vsub.s32 %v281, %v283
      %v285 = vrot.slane %v277, %v284
      %v286 = vcombine.high %v285, %v285
      %v288 = vunpack.c.l.s4 1966171168
      %v289 = vunpack.c.0.s8 %v288
      %v290 = vlaneseq
      %v291 = vshrl.u32 %v290, 7
      %v292 = vsub.s32 %v289, %v291
      %v293 = vrot.slane %v285, %v292
      %v295 = vunpack.c.l.s4 1966171168
      %v296 = vunpack.c.0.s8 %v295
      %v297 = vlaneseq
      %v298 = vshrl.u32 %v297, 7
      %v299 = vsub.s32 %v296, %v298
      %v300 = vrot.slane %v286, %v299
      %303 = vst.msk [vmem:[#allocation7 + $0x1] sm:$0x1] %vm224, %v293
      %304 = vst.msk [vmem:[#allocation7 + $0x3] sm:$0x1] %vm224, %v300
    $region21: #{tpu_custom_call.1} parent=1 // pred_fallthru
      _
    // Predicated region
    $region22: #{tpu_custom_call.1} parent=1 // pred_check
      _
    $region23: #{tpu_custom_call.1} parent=1 // pred_check_branch
      %306 = sbr.rel (0) target = $region25
    $region24: #{tpu_custom_call.1} parent=1 // pred_region
      %s308 = ssub.s32 64, 64
      %309 = vsyncadd [#allocation6], %s308
      %s310 = sshll.u32 [#allocation7], 4
      %s311 = int_to_ptr.vmem [resolvable:$true] %s310
      %316 = dma.vmem_to_hbm [thread:$0]  %s311, 64, %s2, [#allocation6], 32, 32, 2
    $region25: #{tpu_custom_call.1} parent=1 // pred_fallthru
      _
    // Predicated region
    $region26: #{tpu_custom_call.1} parent=1 // pred_check
      _
    $region27: #{tpu_custom_call.1} parent=1 // pred_check_branch
      %318 = sbr.rel (0) target = $region29
    $region28: #{tpu_custom_call.1} parent=1 // pred_region
      %319 = dma.done [#allocation6], 64
    $region29: #{tpu_custom_call.1} parent=1 // pred_fallthru
      _
    %320 = vsyncpa [#allocation5], 1
    %321 = vsyncpa [#allocation6], 1

</llo_original>
